<compile_context>
chip_gen: v7x
topology: tpu7x:2x2x1
jax: 0.10.0
libtpu: 0.0.40
codegen_flags: <defaults>
</compile_context>

<pallas_src>
import jax
import jax.numpy as jnp
from jax.experimental import pallas as pl
from jax.experimental.pallas import tpu as pltpu


def _make_gauss_kernel(scale):
    # TODO(synk): scale is baked in as a compile-time constant (matches the
    # nn.Module where it is a constructor arg); a traced scale would need an
    # SMEM scalar operand instead.
    scale = float(scale)

    def _gauss_kernel(x_ref, o_ref):
        sx = x_ref[...] * scale            # (scale * x), same dtype as input
        o_ref[...] = jnp.exp(-(sx * sx))   # 3 VALU ops + 1 EUP exp per vreg
    return _gauss_kernel


def _round_up(a, b):
    return ((a + b - 1) // b) * b


def _device_tuning():
    """(target_block_bytes, min_blocks, vmem_limit_bytes) per TPU generation."""
    try:
        kind = jax.devices()[0].device_kind.lower()
    except Exception:
        kind = ""
    if "v7" in kind:
        # ~3.2 TB/s per TC: 8 MiB blocks keep the ~0.35us/step overhead <10%.
        # 4 buffers * 8 MiB = 32 MiB == scoped default, so raise the limit.
        # 2 TCs shard the parallel axis -> want >= 2 steps per core (4 blocks).
        return 8 * 1024 * 1024, 4, 48 * 1024 * 1024
    if "v6" in kind:
        # 4 buffers * 4 MiB = 16 MiB, well under the 32 MiB scoped default.
        return 4 * 1024 * 1024, 2, None
    # v5e (and unknown): 4 * 2 MiB = 8 MiB fits the 16 MiB scoped default.
    return 2 * 1024 * 1024, 2, None


def gauss(x, scale=1.0):
    """Elementwise exp(-(scale*x)^2), matching torch semantics and dtype."""
    orig_shape = x.shape
    n = x.size
    if n == 0:
        return x
    itemsize = x.dtype.itemsize
    sublane = max(8, 32 // itemsize)  # 8 for f32, 16 for bf16, 32 for int8/fp8

    x_flat = jnp.reshape(x, (-1,))

    def _tail_ref(v):  # plain-JAX fallback for the sub-128-element remainder
        sv = v * float(scale)
        return jnp.exp(-(sv * sv))

    # Widest lane-dense last dim (multiple of 128) that divides n.
    lanes = 128
    for cand in (8192, 4096, 2048, 1024, 512, 256, 128):
        if n % cand == 0:
            lanes = cand
            break
    n_main = (n // lanes) * lanes  # largest lane-aligned prefix

    if n_main == 0:
        # Tiny array (< 128 elements): no kernel launch, just compute it.
        return jnp.reshape(_tail_ref(x_flat), orig_shape)

    rows = n_main // lanes
    x2d = jnp.reshape(x_flat if n_main == n else x_flat[:n_main], (rows, lanes))

    target_block_bytes, min_blocks, vmem_limit = _device_tuning()

    if rows <= sublane:
        block_rows = rows  # full extent; (sublane,128) rule satisfied by equality
    else:
        block_rows = (target_block_bytes // (lanes * itemsize)) // sublane * sublane
        block_rows = max(sublane, block_rows)
        # Keep >= min_blocks grid steps so every TensorCore gets >= 2 steps
        # (v7x: 2 TCs on the "parallel" axis) and DMA stays double-buffered.
        cap_rows = _round_up(pl.cdiv(rows, min_blocks), sublane)
        block_rows = min(block_rows, cap_rows, _round_up(rows, sublane))

    grid = (pl.cdiv(rows, block_rows),)

    cost = pl.CostEstimate(
        flops=3 * n_main,
        transcendentals=n_main,
        bytes_accessed=2 * n_main * itemsize,
    )

    cp_kwargs = dict(dimension_semantics=("parallel",))
    if vmem_limit is not None:
        cp_kwargs["vmem_limit_bytes"] = vmem_limit

    out2d = pl.pallas_call(
        _make_gauss_kernel(scale),
        out_shape=jax.ShapeDtypeStruct((rows, lanes), x2d.dtype),
        grid_spec=pl.GridSpec(
            grid=grid,
            in_specs=[pl.BlockSpec((block_rows, lanes), lambda i: (i, 0))],
            out_specs=pl.BlockSpec((block_rows, lanes), lambda i: (i, 0)),
        ),
        compiler_params=pltpu.CompilerParams(**cp_kwargs),
        cost_estimate=cost,
    )(x2d)

    out_flat = jnp.reshape(out2d, (-1,))
    if n_main != n:
        # Ragged remainder (< 128 elements): no pad/slice round-trip over the
        # whole array, just compute the tail directly and append it.
        tail = _tail_ref(x_flat[n_main:]).astype(out_flat.dtype)
        out_flat = jnp.concatenate([out_flat, tail], axis=0)
    return jnp.reshape(out_flat, orig_shape)


if __name__ == "__main__":
    key = jax.random.PRNGKey(0)
    scale = 1.0

    # NCHW-style input consistent with typical use of the nonlinearity.
    x = jax.random.normal(key, (2, 4, 16, 16), dtype=jnp.float32)
    y = jax.block_until_ready(gauss(x, scale=scale))
    y_ref = jnp.exp(-(scale * x) ** 2)
    assert y.shape == x.shape and y.dtype == x.dtype
    assert jnp.allclose(y, y_ref, atol=1e-5, rtol=1e-5), "mismatch vs reference"

    # Ragged size with a lane-aligned prefix + <128-element tail.
    x2 = jax.random.normal(jax.random.PRNGKey(1), (5, 7, 9), dtype=jnp.float32)
    y2 = jax.block_until_ready(gauss(x2, scale=0.5))
    y2_ref = jnp.exp(-(0.5 * x2) ** 2)
    assert y2.shape == x2.shape and y2.dtype == x2.dtype
    assert jnp.allclose(y2, y2_ref, atol=1e-5, rtol=1e-5), "mismatch (ragged)"

    # Tiny (<128 elements): pure-JAX fallback path.
    x3 = jax.random.normal(jax.random.PRNGKey(2), (3, 5, 7), dtype=jnp.float32)
    y3 = jax.block_until_ready(gauss(x3, scale=0.5))
    y3_ref = jnp.exp(-(0.5 * x3) ** 2)
    assert jnp.allclose(y3, y3_ref, atol=1e-5, rtol=1e-5), "mismatch (tiny)"

    # Multi-block grid with a partial last block.
    x4 = jax.random.normal(jax.random.PRNGKey(3), (4, 8, 33, 128), dtype=jnp.float32)
    y4 = jax.block_until_ready(gauss(x4, scale=2.0))
    y4_ref = jnp.exp(-(2.0 * x4) ** 2)
    assert y4.shape == x4.shape and y4.dtype == x4.dtype
    assert jnp.allclose(y4, y4_ref, atol=1e-5, rtol=1e-5), "mismatch (multi-block)"

    # bf16 input: exercises sublane-tile-aware (16-row) rounding.
    x5 = jax.random.normal(jax.random.PRNGKey(4), (2, 64, 128), dtype=jnp.bfloat16)
    y5 = jax.block_until_ready(gauss(x5, scale=1.5))
    y5_ref = jnp.exp(-(1.5 * x5.astype(jnp.float32)) ** 2)
    assert y5.shape == x5.shape and y5.dtype == x5.dtype
    assert jnp.allclose(y5.astype(jnp.float32), y5_ref, atol=2e-2, rtol=2e-2), "mismatch (bf16)"

    print("KERNEL_OK")
</pallas_src>

<mosaic_0001>
module attributes {stable_mosaic.version = 11 : i64} {
  func.func @_gauss_kernel(%arg0: i32, %arg1: memref<1x2048xf32, #tpu.memory_space<vmem>>, %arg2: memref<1x2048xf32, #tpu.memory_space<vmem>>) attributes {dimension_semantics = [#tpu.dimension_semantics<parallel>], iteration_bounds = array<i64: 1>, scalar_prefetch = 0 : i64, scratch_operands = 0 : i64, tpu.core_type = #tpu.core_type<tc>, window_params = [{transform_indices = @transform_0, window_bounds = array<i64: 1, 2048>}, {transform_indices = @transform_1, window_bounds = array<i64: 1, 2048>}]} {
    %c0 = arith.constant 0 : index
    %c0_0 = arith.constant 0 : index
    %0 = vector.load %arg1[%c0, %c0_0] : memref<1x2048xf32, #tpu.memory_space<vmem>>, vector<1x2048xf32>
    %cst = arith.constant 1.000000e+00 : f32
    %1 = vector.broadcast %cst : f32 to vector<1x2048xf32>
    %2 = arith.mulf %0, %1 : vector<1x2048xf32>
    %3 = arith.mulf %2, %2 : vector<1x2048xf32>
    %cst_1 = arith.constant 0.000000e+00 : f32
    %4 = vector.broadcast %cst_1 : f32 to vector<1x2048xf32>
    %5 = arith.subf %4, %3 : vector<1x2048xf32>
    %6 = math.exp %5 : vector<1x2048xf32>
    %c0_2 = arith.constant 0 : index
    %c0_3 = arith.constant 0 : index
    %7 = vector.load %arg2[%c0_2, %c0_3] : memref<1x2048xf32, #tpu.memory_space<vmem>>, vector<1x2048xf32>
    tpu.vector_store %arg2[%c0_2, %c0_3], %6 {strides = array<i32>} : memref<1x2048xf32, #tpu.memory_space<vmem>>, vector<1x2048xf32>,
    return
  }
  func.func @transform_0(%arg0: i32) -> (i32, i32) {
    %c0_i32 = arith.constant 0 : i32
    %c0_i32_0 = arith.constant 0 : i32
    return %arg0, %c0_i32 : i32, i32
  }
  func.func @transform_1(%arg0: i32) -> (i32, i32) {
    %c0_i32 = arith.constant 0 : i32
    %c0_i32_0 = arith.constant 0 : i32
    return %arg0, %c0_i32 : i32, i32
  }
}

</mosaic_0001>

<llo_original>
// kernel: tpu_custom_call.1
$region0: #{tpu_custom_call.1}
  #allocation0 [shape = 'u32[]', space=smem, size = 0x4, offset = 0x4, fixed_abs, tag = 'smem constant byte address 0x4 - core index']
  #allocation1 [shape = 'u32[144,128]{1,0:T(1,128)}', space=vmem, size = 0x12000, scoped, tag = 'internal scratch']
  %s0 = inlined_call_operand.hbm [shape: f32[1,2048], index: 0, kind: input, shape index: {}]
  %s1 = inlined_call_operand.hbm [shape: f32[1,2048], index: 1, kind: output, shape index: {}]
  %s2 = sld [smem:[#allocation0]]
  $region18: #{tpu_custom_call.1} parent=0
    _
  %s4 = ssub.s32 1, %s2
  %s5 = scalar_select 0, %s4, %s2
  $region1: #{tpu_custom_call.1} parent=0
    #allocation2 [shape = 'u8[8192]{0}', space=vmem, size = 0x2000, scoped, tag = 'input window, operand 0, single buffered']
    #allocation3 [shape = 's32[1]{0}', space=sflag, size = 0x4, scoped, tag = 'scoped memory for tpu_custom_call.1']
    #allocation4 [shape = 's32[1]{0}', space=sflag, size = 0x4, scoped, tag = 'scoped memory for tpu_custom_call.1']
    #allocation5 [shape = 'u8[8192]{0}', space=vmem, size = 0x2000, scoped, tag = 'output window, operand 0, single buffered']
    %6 = vsyncpa [#allocation3], 0
    %7 = vsyncpa [#allocation4], 0
    // Predicated region
    $region2: #{tpu_custom_call.1} parent=1 // pred_check
      _
    $region3: #{tpu_custom_call.1} parent=1 // pred_check_branch
      %9 = sbr.rel (0) target = $region5
    $region4: #{tpu_custom_call.1} parent=1 // pred_region
      %s11 = ssub.s32 256, 256
      %12 = vsyncadd [#allocation3], %s11
      %s14 = sshll.u32 [#allocation2], 4
      %s15 = int_to_ptr.vmem [resolvable:$true] %s14
      %17 = dma.hbm_to_vmem [thread:$0]  %s0, 256, %s15, [#allocation3]
    $region5: #{tpu_custom_call.1} parent=1 // pred_fallthru
      _
    // Predicated region
    $region6: #{tpu_custom_call.1} parent=1 // pred_check
      _
    $region7: #{tpu_custom_call.1} parent=1 // pred_check_branch
      %19 = sbr.rel (0) target = $region9
    $region8: #{tpu_custom_call.1} parent=1 // pred_region
      %20 = dma.done [#allocation3], 256
    $region9: #{tpu_custom_call.1} parent=1 // pred_fallthru
      _
    %v21 = vld [vmem:[#allocation2] sm:$0xff]
    %v22 = vld [vmem:[#allocation2 + $0x8] sm:$0xff]
    %v23 = vmul.f32 %v21, %v21
    %v24 = vmul.f32 %v22, %v22
    %v25 = vsub.f32 0.0, %v23
    %v26 = vsub.f32 0.0, %v24
    %v27 = vmul.f32 %v25, 1.442695
    %v28 = vpow.pop %v27
    %v29 = vmul.f32 %v26, 1.442695
    %v30 = vpow.pop %v29
    %31 = vst [vmem:[#allocation5] sm:$0xff] %v28
    %32 = vst [vmem:[#allocation5 + $0x8] sm:$0xff] %v30
    // Predicated region
    $region10: #{tpu_custom_call.1} parent=1 // pred_check
      _
    $region11: #{tpu_custom_call.1} parent=1 // pred_check_branch
      %34 = sbr.rel (0) target = $region13
    $region12: #{tpu_custom_call.1} parent=1 // pred_region
      %s36 = ssub.s32 256, 256
      %37 = vsyncadd [#allocation4], %s36
      %s39 = sshll.u32 [#allocation5], 4
      %s40 = int_to_ptr.vmem [resolvable:$true] %s39
      %42 = dma.vmem_to_hbm [thread:$0]  %s40, 256, %s1, [#allocation4]
    $region13: #{tpu_custom_call.1} parent=1 // pred_fallthru
      _
    // Predicated region
    $region14: #{tpu_custom_call.1} parent=1 // pred_check
      _
    $region15: #{tpu_custom_call.1} parent=1 // pred_check_branch
      %44 = sbr.rel (0) target = $region17
    $region16: #{tpu_custom_call.1} parent=1 // pred_region
      %45 = dma.done [#allocation4], 256
    $region17: #{tpu_custom_call.1} parent=1 // pred_fallthru
      _
    %46 = vsyncpa [#allocation3], 1
    %47 = vsyncpa [#allocation4], 1

</llo_original>
